<compile_context>
chip_gen: v6e
topology: v6e:2x2x1
jax: 0.10.0
libtpu: 0.0.40
codegen_flags: <defaults>
</compile_context>

<pallas_src>
import math
import jax
import jax.numpy as jnp
from jax.experimental import pallas as pl
from jax.experimental.pallas import tpu as pltpu


def _glstm_kernel(x_ref, a_ref, h0_ref, c0_ref,
                  wn_ref, bn_ref,
                  wx_ref, wh_ref, b_ref, wrow_ref,
                  out_ref,
                  h_s, c_s):
    """One time step for the whole batch.  Grid = (T,), state carried in VMEM."""
    t = pl.program_id(0)

    # (re)initialize the carried state at the start of the sequence
    @pl.when(t == 0)
    def _():
        h_s[...] = h0_ref[...]
        c_s[...] = c0_ref[...]

    f32 = jnp.float32

    x_t = x_ref[...]                     # (B, R, P)
    a_t = a_ref[...]                     # (B, R, R)
    B, R, P = x_t.shape
    H = h_s.shape[-1]

    h = h_s[...]                         # (B*R, H)
    c = c_s[...]                         # (B*R, H)

    # ax_t = a_t @ x_t @ Wn + bn   (batched adjacency product, then shared Wn)
    ax = jnp.einsum('brq,bqp->brp', a_t, x_t, preferred_element_type=f32)
    ax = ax.reshape(B * R, P)
    ax = jnp.dot(ax, wn_ref[...], preferred_element_type=f32) + bn_ref[...]

    x_flat = x_t.reshape(B * R, P)

    # Combined gate pre-activations: one (B*R, 2P) @ (2P, 4H) + one
    # (B*R, H) @ (H, 4H) matmul -> (B*R, 4H).  Gate order: [i | f | g | o];
    # the o-gate column block of wx_ref holds W_io (driven by ax), the i/f/g
    # column blocks hold W_ii/W_if/W_ig (driven by x).
    xin = jnp.concatenate([x_flat, ax], axis=-1)        # (B*R, 2P)
    pre = (jnp.dot(xin, wx_ref[...], preferred_element_type=f32)
           + jnp.dot(h, wh_ref[...], preferred_element_type=f32)
           + b_ref[...])                                # (B*R, 4H)

    # diag_embed(sigmoid(.) @ W) @ M  ==  rowwise scalar * M, where the scalar
    # is a lane-reduction of sigmoid(pre_gate) * W  (VPU + XLU, no MXU).
    w_row = wrow_ref[...]                               # (1, H)
    i_s = jnp.sum(jax.nn.sigmoid(pre[:, 0:H]) * w_row, axis=-1, keepdims=True)
    f_s = jnp.sum(jax.nn.sigmoid(pre[:, H:2 * H]) * w_row, axis=-1, keepdims=True)
    o_s = jnp.sum(jax.nn.sigmoid(pre[:, 3 * H:4 * H]) * w_row, axis=-1, keepdims=True)
    g = jnp.tanh(pre[:, 2 * H:3 * H])                   # (B*R, H)

    c_new = f_s * c + i_s * g
    h_new = o_s * jnp.tanh(c_new)

    c_s[...] = c_new
    h_s[...] = h_new
    out_ref[...] = h_new.astype(out_ref.dtype)


def glstm_forward(x_seq, a_seq, h0, c0, params):
    T, B, R, P = x_seq.shape
    H = params["W_hi"].shape[0]
    f32 = jnp.float32

    # ---- host-side weight packing (done once, outside the kernel) ----
    # Block x-side weight: rows [0:P) take x_t (gates i,f,g), rows [P:2P) take
    # ax_t (gate o).  Columns: [i | f | g | o], each H wide.
    wx = jnp.zeros((2 * P, 4 * H), f32)
    wx = wx.at[:P, 0 * H:1 * H].set(params["W_ii"].astype(f32))
    wx = wx.at[:P, 1 * H:2 * H].set(params["W_if"].astype(f32))
    wx = wx.at[:P, 2 * H:3 * H].set(params["W_ig"].astype(f32))
    wx = wx.at[P:, 3 * H:4 * H].set(params["W_io"].astype(f32))

    wh = jnp.concatenate([params["W_hi"], params["W_hf"],
                          params["W_hg"], params["W_ho"]], axis=1)       # (H, 4H)

    b_cat = jnp.concatenate([params["b_ii"] + params["b_hi"],
                             params["b_if"] + params["b_hf"],
                             params["b_ig"] + params["b_hg"],
                             params["b_io"] + params["b_ho"]]).reshape(1, 4 * H)
    bn2 = params["bn"].reshape(1, P)
    w_row = params["W"].reshape(1, H)

    # flat (contiguous, free) views of the initial state
    h0f = h0.reshape(B * R, H)
    c0f = c0.reshape(B * R, H)

    def const_spec(shape):
        return pl.BlockSpec(shape, lambda t: (0,) * len(shape))

    in_specs = [
        pl.BlockSpec((None, B, R, P), lambda t: (t, 0, 0, 0)),   # x_seq
        pl.BlockSpec((None, B, R, R), lambda t: (t, 0, 0, 0)),   # a_seq
        const_spec((B * R, H)),                                  # h0
        const_spec((B * R, H)),                                  # c0
        const_spec((P, P)),                                      # Wn
        const_spec((1, P)),                                      # bn
        const_spec((2 * P, 4 * H)),                              # Wx (block)
        const_spec((H, 4 * H)),                                  # Wh (concat)
        const_spec((1, 4 * H)),                                  # combined bias
        const_spec((1, H)),                                      # W row
    ]
    out_specs = pl.BlockSpec((None, B * R, H), lambda t: (t, 0, 0))

    hidden = pl.pallas_call(
        _glstm_kernel,
        out_shape=jax.ShapeDtypeStruct((T, B * R, H), jnp.float32),
        grid_spec=pltpu.PrefetchScalarGridSpec(
            num_scalar_prefetch=0,
            grid=(T,),
            in_specs=in_specs,
            out_specs=out_specs,
            scratch_shapes=[pltpu.VMEM((B * R, H), jnp.float32),   # h state
                            pltpu.VMEM((B * R, H), jnp.float32)],  # c state
        ),
        compiler_params=pltpu.CompilerParams(
            dimension_semantics=("arbitrary",)),
    )(x_seq, a_seq, h0f, c0f, params["Wn"], bn2, wx, wh, b_cat, w_row)

    # (T, B*R, H) -> (T, B, R*H): contiguous row-major, metadata-only reshape.
    return hidden.reshape(T, B, R * H)


def ref_forward(x_seq, a_seq, h0, c0, p):
    """Pure-JAX reference mirroring the torch forward (num_layers=1)."""
    T = x_seq.shape[0]
    h, c = h0, c0
    outs = []
    for t in range(T):
        x_t, a_t = x_seq[t], a_seq[t]
        ax = a_t @ x_t @ p["Wn"] + p["bn"]
        i = jax.nn.sigmoid(x_t @ p["W_ii"] + p["b_ii"] + h @ p["W_hi"] + p["b_hi"]) @ p["W"]
        f = jax.nn.sigmoid(x_t @ p["W_if"] + p["b_if"] + h @ p["W_hf"] + p["b_hf"]) @ p["W"]
        g = jnp.tanh(x_t @ p["W_ig"] + p["b_ig"] + h @ p["W_hg"] + p["b_hg"])
        o = jax.nn.sigmoid(ax @ p["W_io"] + p["b_io"] + h @ p["W_ho"] + p["b_ho"]) @ p["W"]
        c = f * c + i * g          # diag_embed(f) @ c + diag_embed(i) @ g
        h = o * jnp.tanh(c)        # diag_embed(o) @ tanh(c)
        outs.append(h)
    return jnp.stack(outs, axis=0).reshape(T, x_seq.shape[1], -1)


def init_params(key, data_row, p_dim, hidden):
    stdv = 1.0 / math.sqrt(hidden)
    shapes = {
        "W": (hidden, 1), "Wn": (p_dim, p_dim), "bn": (p_dim,),
        "W_ii": (p_dim, hidden), "W_hi": (hidden, hidden), "b_ii": (hidden,), "b_hi": (hidden,),
        "W_if": (p_dim, hidden), "W_hf": (hidden, hidden), "b_if": (hidden,), "b_hf": (hidden,),
        "W_ig": (p_dim, hidden), "W_hg": (hidden, hidden), "b_ig": (hidden,), "b_hg": (hidden,),
        "W_io": (p_dim, hidden), "W_ho": (hidden, hidden), "b_io": (hidden,), "b_ho": (hidden,),
    }
    params = {}
    for name, shp in shapes.items():
        key, sub = jax.random.split(key)
        params[name] = jax.random.uniform(sub, shp, jnp.float32, -stdv, stdv)
    return params


if __name__ == "__main__":
    # small shapes consistent with the module's forward
    T, B, R, P, H = 4, 2, 8, 8, 32      # seq, batch, data_row, p, hidden_size

    key = jax.random.PRNGKey(0)
    kx, ka, kh, kc, kp = jax.random.split(key, 5)
    x_seq = jax.random.normal(kx, (T, B, R, P), jnp.float32)
    a_seq = jax.random.normal(ka, (T, B, R, R), jnp.float32)
    # torch forward draws h0/c0 with randn inside forward; deterministic draws here
    h0 = jax.random.normal(kh, (B, R, H), jnp.float32)
    c0 = jax.random.normal(kc, (B, R, H), jnp.float32)
    params = init_params(kp, R, P, H)

    out = glstm_forward(x_seq, a_seq, h0, c0, params)
    out = jax.block_until_ready(out)

    expected = ref_forward(x_seq, a_seq, h0, c0, params)
    assert out.shape == (T, B, R * H), out.shape
    assert jnp.allclose(out, expected, atol=1e-4, rtol=1e-4), \
        float(jnp.max(jnp.abs(out - expected)))

    print("KERNEL_OK")
</pallas_src>

<mosaic_0001>
module attributes {stable_mosaic.version = 11 : i64} {
  func.func @_glstm_kernel(%arg0: i32, %arg1: memref<1x2x8x8xf32, #tpu.memory_space<vmem>>, %arg2: memref<1x2x8x8xf32, #tpu.memory_space<vmem>>, %arg3: memref<16x32xf32, #tpu.memory_space<vmem>>, %arg4: memref<16x32xf32, #tpu.memory_space<vmem>>, %arg5: memref<8x8xf32, #tpu.memory_space<vmem>>, %arg6: memref<1x8xf32, #tpu.memory_space<vmem>>, %arg7: memref<16x128xf32, #tpu.memory_space<vmem>>, %arg8: memref<32x128xf32, #tpu.memory_space<vmem>>, %arg9: memref<1x128xf32, #tpu.memory_space<vmem>>, %arg10: memref<1x32xf32, #tpu.memory_space<vmem>>, %arg11: memref<1x16x32xf32, #tpu.memory_space<vmem>>, %arg12: memref<16x32xf32, #tpu.memory_space<vmem>>, %arg13: memref<16x32xf32, #tpu.memory_space<vmem>>) attributes {dimension_semantics = [#tpu.dimension_semantics<arbitrary>], iteration_bounds = array<i64: 4>, scalar_prefetch = 0 : i64, scratch_operands = 2 : i64, tpu.core_type = #tpu.core_type<tc>, window_params = [{transform_indices = @transform_0, window_bounds = array<i64: 1, 2, 8, 8>}, {transform_indices = @transform_1, window_bounds = array<i64: 1, 2, 8, 8>}, {pipeline_mode = #tpu.pipeline_mode<synchronous>, transform_indices = @transform_2, window_bounds = array<i64: 16, 32>}, {pipeline_mode = #tpu.pipeline_mode<synchronous>, transform_indices = @transform_3, window_bounds = array<i64: 16, 32>}, {pipeline_mode = #tpu.pipeline_mode<synchronous>, transform_indices = @transform_4, window_bounds = array<i64: 8, 8>}, {pipeline_mode = #tpu.pipeline_mode<synchronous>, transform_indices = @transform_5, window_bounds = array<i64: 1, 8>}, {pipeline_mode = #tpu.pipeline_mode<synchronous>, transform_indices = @transform_6, window_bounds = array<i64: 16, 128>}, {pipeline_mode = #tpu.pipeline_mode<synchronous>, transform_indices = @transform_7, window_bounds = array<i64: 32, 128>}, {pipeline_mode = #tpu.pipeline_mode<synchronous>, transform_indices = @transform_8, window_bounds = array<i64: 1, 128>}, {pipeline_mode = #tpu.pipeline_mode<synchronous>, transform_indices = @transform_9, window_bounds = array<i64: 1, 32>}, {transform_indices = @transform_10, window_bounds = array<i64: 1, 16, 32>}]} {
    %c0_i32 = arith.constant 0 : i32
    %0 = arith.cmpi eq, %arg0, %c0_i32 : i32
    %1 = arith.extui %0 : i1 to i32
    %c0_i32_0 = arith.constant 0 : i32
    %2 = arith.cmpi ne, %1, %c0_i32_0 : i32
    scf.if %2 {
      %c0_40 = arith.constant 0 : index
      %c0_41 = arith.constant 0 : index
      %72 = vector.load %arg3[%c0_40, %c0_41] : memref<16x32xf32, #tpu.memory_space<vmem>>, vector<16x32xf32>
      %c0_42 = arith.constant 0 : index
      %c0_43 = arith.constant 0 : index
      %73 = vector.load %arg12[%c0_42, %c0_43] : memref<16x32xf32, #tpu.memory_space<vmem>>, vector<16x32xf32>
      tpu.vector_store %arg12[%c0_42, %c0_43], %72 {strides = array<i32>} : memref<16x32xf32, #tpu.memory_space<vmem>>, vector<16x32xf32>,
      %c0_44 = arith.constant 0 : index
      %c0_45 = arith.constant 0 : index
      %74 = vector.load %arg4[%c0_44, %c0_45] : memref<16x32xf32, #tpu.memory_space<vmem>>, vector<16x32xf32>
      %c0_46 = arith.constant 0 : index
      %c0_47 = arith.constant 0 : index
      %75 = vector.load %arg13[%c0_46, %c0_47] : memref<16x32xf32, #tpu.memory_space<vmem>>, vector<16x32xf32>
      tpu.vector_store %arg13[%c0_46, %c0_47], %74 {strides = array<i32>} : memref<16x32xf32, #tpu.memory_space<vmem>>, vector<16x32xf32>,
    } else {
    }
    %c0 = arith.constant 0 : index
    %c0_1 = arith.constant 0 : index
    %c0_2 = arith.constant 0 : index
    %c0_3 = arith.constant 0 : index
    %3 = vector.load %arg1[%c0, %c0_1, %c0_2, %c0_3] : memref<1x2x8x8xf32, #tpu.memory_space<vmem>>, vector<1x2x8x8xf32>
    %4 = vector.shape_cast %3 : vector<1x2x8x8xf32> to vector<2x8x8xf32>
    %c0_4 = arith.constant 0 : index
    %c0_5 = arith.constant 0 : index
    %c0_6 = arith.constant 0 : index
    %c0_7 = arith.constant 0 : index
    %5 = vector.load %arg2[%c0_4, %c0_5, %c0_6, %c0_7] : memref<1x2x8x8xf32, #tpu.memory_space<vmem>>, vector<1x2x8x8xf32>
    %6 = vector.shape_cast %5 : vector<1x2x8x8xf32> to vector<2x8x8xf32>
    %c0_8 = arith.constant 0 : index
    %c0_9 = arith.constant 0 : index
    %7 = vector.load %arg12[%c0_8, %c0_9] : memref<16x32xf32, #tpu.memory_space<vmem>>, vector<16x32xf32>
    %c0_10 = arith.constant 0 : index
    %c0_11 = arith.constant 0 : index
    %8 = vector.load %arg13[%c0_10, %c0_11] : memref<16x32xf32, #tpu.memory_space<vmem>>, vector<16x32xf32>
    "tpu.trace_start"() <{level = 10 : i32, message = "brq,bqp->brp"}> : () -> ()
    %cst = arith.constant dense<0.000000e+00> : vector<2x8x8xf32>
    %9 = tpu.matmul %6, %4, %cst {dimension_numbers = #tpu.dot_dimension_numbers<[2], [1], [1], [2], [0, 0, 0, 1, 1, 2], [0], [0]>} : vector<2x8x8xf32>, vector<2x8x8xf32>, vector<2x8x8xf32> -> vector<2x8x8xf32>
    "tpu.trace_stop"() : () -> ()
    %10 = vector.shape_cast %9 : vector<2x8x8xf32> to vector<16x8xf32>
    %c0_12 = arith.constant 0 : index
    %c0_13 = arith.constant 0 : index
    %11 = vector.load %arg5[%c0_12, %c0_13] : memref<8x8xf32, #tpu.memory_space<vmem>>, vector<8x8xf32>
    %cst_14 = arith.constant dense<0.000000e+00> : vector<16x8xf32>
    %12 = tpu.matmul %10, %11, %cst_14 {dimension_numbers = #tpu.dot_dimension_numbers<[1], [0], [0], [1], [0, 0, 1, 1], [], []>} : vector<16x8xf32>, vector<8x8xf32>, vector<16x8xf32> -> vector<16x8xf32>
    %c0_15 = arith.constant 0 : index
    %c0_16 = arith.constant 0 : index
    %13 = vector.load %arg6[%c0_15, %c0_16] : memref<1x8xf32, #tpu.memory_space<vmem>>, vector<1x8xf32>
    %14 = vector.broadcast %13 : vector<1x8xf32> to vector<16x8xf32>
    %15 = arith.addf %12, %14 : vector<16x8xf32>
    %16 = vector.shape_cast %4 : vector<2x8x8xf32> to vector<16x8xf32>
    %17 = tpu.concatenate %16, %15 in 1 : vector<16x8xf32>, vector<16x8xf32> -> vector<16x16xf32>
    %c0_17 = arith.constant 0 : index
    %c0_18 = arith.constant 0 : index
    %18 = vector.load %arg7[%c0_17, %c0_18] : memref<16x128xf32, #tpu.memory_space<vmem>>, vector<16x128xf32>
    %cst_19 = arith.constant dense<0.000000e+00> : vector<16x128xf32>
    %19 = tpu.matmul %17, %18, %cst_19 {dimension_numbers = #tpu.dot_dimension_numbers<[1], [0], [0], [1], [0, 0, 1, 1], [], []>} : vector<16x16xf32>, vector<16x128xf32>, vector<16x128xf32> -> vector<16x128xf32>
    %c0_20 = arith.constant 0 : index
    %c0_21 = arith.constant 0 : index
    %20 = vector.load %arg8[%c0_20, %c0_21] : memref<32x128xf32, #tpu.memory_space<vmem>>, vector<32x128xf32>
    %cst_22 = arith.constant dense<0.000000e+00> : vector<16x128xf32>
    %21 = tpu.matmul %7, %20, %cst_22 {dimension_numbers = #tpu.dot_dimension_numbers<[1], [0], [0], [1], [0, 0, 1, 1], [], []>} : vector<16x32xf32>, vector<32x128xf32>, vector<16x128xf32> -> vector<16x128xf32>
    %22 = arith.addf %19, %21 : vector<16x128xf32>
    %c0_23 = arith.constant 0 : index
    %c0_24 = arith.constant 0 : index
    %23 = vector.load %arg9[%c0_23, %c0_24] : memref<1x128xf32, #tpu.memory_space<vmem>>, vector<1x128xf32>
    %24 = vector.broadcast %23 : vector<1x128xf32> to vector<16x128xf32>
    %25 = arith.addf %22, %24 : vector<16x128xf32>
    %c0_25 = arith.constant 0 : index
    %c0_26 = arith.constant 0 : index
    %26 = vector.load %arg10[%c0_25, %c0_26] : memref<1x32xf32, #tpu.memory_space<vmem>>, vector<1x32xf32>
    %27 = vector.extract_strided_slice %25 {offsets = [0, 0], sizes = [16, 32], strides = [1, 1]} : vector<16x128xf32> to vector<16x32xf32>
    %28 = arith.negf %27 : vector<16x32xf32>
    %29 = math.exp %28 : vector<16x32xf32>
    %cst_27 = arith.constant 1.000000e+00 : f32
    %30 = vector.broadcast %cst_27 : f32 to vector<16x32xf32>
    %31 = arith.addf %30, %29 : vector<16x32xf32>
    %32 = arith.divf %30, %31 : vector<16x32xf32>
    %33 = vector.broadcast %26 : vector<1x32xf32> to vector<16x32xf32>
    %34 = arith.mulf %32, %33 : vector<16x32xf32>
    %cst_28 = arith.constant dense<0.000000e+00> : vector<16xf32>
    %35 = vector.multi_reduction <add>, %34, %cst_28 [1] : vector<16x32xf32> to vector<16xf32>
    %36 = vector.shape_cast %35 : vector<16xf32> to vector<16x1xf32>
    %37 = vector.extract_strided_slice %25 {offsets = [0, 32], sizes = [16, 32], strides = [1, 1]} : vector<16x128xf32> to vector<16x32xf32>
    %38 = arith.negf %37 : vector<16x32xf32>
    %39 = math.exp %38 : vector<16x32xf32>
    %cst_29 = arith.constant 1.000000e+00 : f32
    %40 = vector.broadcast %cst_29 : f32 to vector<16x32xf32>
    %41 = arith.addf %40, %39 : vector<16x32xf32>
    %42 = arith.divf %40, %41 : vector<16x32xf32>
    %43 = vector.broadcast %26 : vector<1x32xf32> to vector<16x32xf32>
    %44 = arith.mulf %42, %43 : vector<16x32xf32>
    %cst_30 = arith.constant dense<0.000000e+00> : vector<16xf32>
    %45 = vector.multi_reduction <add>, %44, %cst_30 [1] : vector<16x32xf32> to vector<16xf32>
    %46 = vector.shape_cast %45 : vector<16xf32> to vector<16x1xf32>
    %47 = vector.extract_strided_slice %25 {offsets = [0, 96], sizes = [16, 32], strides = [1, 1]} : vector<16x128xf32> to vector<16x32xf32>
    %48 = arith.negf %47 : vector<16x32xf32>
    %49 = math.exp %48 : vector<16x32xf32>
    %cst_31 = arith.constant 1.000000e+00 : f32
    %50 = vector.broadcast %cst_31 : f32 to vector<16x32xf32>
    %51 = arith.addf %50, %49 : vector<16x32xf32>
    %52 = arith.divf %50, %51 : vector<16x32xf32>
    %53 = vector.broadcast %26 : vector<1x32xf32> to vector<16x32xf32>
    %54 = arith.mulf %52, %53 : vector<16x32xf32>
    %cst_32 = arith.constant dense<0.000000e+00> : vector<16xf32>
    %55 = vector.multi_reduction <add>, %54, %cst_32 [1] : vector<16x32xf32> to vector<16xf32>
    %56 = vector.shape_cast %55 : vector<16xf32> to vector<16x1xf32>
    %57 = vector.extract_strided_slice %25 {offsets = [0, 64], sizes = [16, 32], strides = [1, 1]} : vector<16x128xf32> to vector<16x32xf32>
    %58 = math.tanh %57 : vector<16x32xf32>
    %59 = vector.broadcast %46 : vector<16x1xf32> to vector<16x32xf32>
    %60 = arith.mulf %59, %8 : vector<16x32xf32>
    %61 = vector.broadcast %36 : vector<16x1xf32> to vector<16x32xf32>
    %62 = arith.mulf %61, %58 : vector<16x32xf32>
    %63 = arith.addf %60, %62 : vector<16x32xf32>
    %64 = math.tanh %63 : vector<16x32xf32>
    %65 = vector.broadcast %56 : vector<16x1xf32> to vector<16x32xf32>
    %66 = arith.mulf %65, %64 : vector<16x32xf32>
    %c0_33 = arith.constant 0 : index
    %c0_34 = arith.constant 0 : index
    %67 = vector.load %arg13[%c0_33, %c0_34] : memref<16x32xf32, #tpu.memory_space<vmem>>, vector<16x32xf32>
    tpu.vector_store %arg13[%c0_33, %c0_34], %63 {strides = array<i32>} : memref<16x32xf32, #tpu.memory_space<vmem>>, vector<16x32xf32>,
    %c0_35 = arith.constant 0 : index
    %c0_36 = arith.constant 0 : index
    %68 = vector.load %arg12[%c0_35, %c0_36] : memref<16x32xf32, #tpu.memory_space<vmem>>, vector<16x32xf32>
    tpu.vector_store %arg12[%c0_35, %c0_36], %66 {strides = array<i32>} : memref<16x32xf32, #tpu.memory_space<vmem>>, vector<16x32xf32>,
    %c0_37 = arith.constant 0 : index
    %c0_38 = arith.constant 0 : index
    %c0_39 = arith.constant 0 : index
    %69 = vector.load %arg11[%c0_37, %c0_38, %c0_39] : memref<1x16x32xf32, #tpu.memory_space<vmem>>, vector<1x16x32xf32>
    %70 = vector.shape_cast %69 : vector<1x16x32xf32> to vector<16x32xf32>
    %71 = vector.shape_cast %66 : vector<16x32xf32> to vector<1x16x32xf32>
    tpu.vector_store %arg11[%c0_37, %c0_38, %c0_39], %71 {strides = array<i32>} : memref<1x16x32xf32, #tpu.memory_space<vmem>>, vector<1x16x32xf32>,
    return
  }
  func.func @transform_0(%arg0: i32) -> (i32, i32, i32, i32) {
    %c0_i32 = arith.constant 0 : i32
    %c0_i32_0 = arith.constant 0 : i32
    %c0_i32_1 = arith.constant 0 : i32
    %c0_i32_2 = arith.constant 0 : i32
    return %arg0, %c0_i32, %c0_i32_0, %c0_i32_1 : i32, i32, i32, i32
  }
  func.func @transform_1(%arg0: i32) -> (i32, i32, i32, i32) {
    %c0_i32 = arith.constant 0 : i32
    %c0_i32_0 = arith.constant 0 : i32
    %c0_i32_1 = arith.constant 0 : i32
    %c0_i32_2 = arith.constant 0 : i32
    return %arg0, %c0_i32, %c0_i32_0, %c0_i32_1 : i32, i32, i32, i32
  }
  func.func @transform_2(%arg0: i32) -> (i32, i32) {
    %c0_i32 = arith.constant 0 : i32
    %c0_i32_0 = arith.constant 0 : i32
    %c0_i32_1 = arith.constant 0 : i32
    return %c0_i32, %c0_i32_0 : i32, i32
  }
  func.func @transform_3(%arg0: i32) -> (i32, i32) {
    %c0_i32 = arith.constant 0 : i32
    %c0_i32_0 = arith.constant 0 : i32
    %c0_i32_1 = arith.constant 0 : i32
    return %c0_i32, %c0_i32_0 : i32, i32
  }
  func.func @transform_4(%arg0: i32) -> (i32, i32) {
    %c0_i32 = arith.constant 0 : i32
    %c0_i32_0 = arith.constant 0 : i32
    %c0_i32_1 = arith.constant 0 : i32
    return %c0_i32, %c0_i32_0 : i32, i32
  }
  func.func @transform_5(%arg0: i32) -> (i32, i32) {
    %c0_i32 = arith.constant 0 : i32
    %c0_i32_0 = arith.constant 0 : i32
    %c0_i32_1 = arith.constant 0 : i32
    return %c0_i32, %c0_i32_0 : i32, i32
  }
  func.func @transform_6(%arg0: i32) -> (i32, i32) {
    %c0_i32 = arith.constant 0 : i32
    %c0_i32_0 = arith.constant 0 : i32
    %c0_i32_1 = arith.constant 0 : i32
    return %c0_i32, %c0_i32_0 : i32, i32
  }
  func.func @transform_7(%arg0: i32) -> (i32, i32) {
    %c0_i32 = arith.constant 0 : i32
    %c0_i32_0 = arith.constant 0 : i32
    %c0_i32_1 = arith.constant 0 : i32
    return %c0_i32, %c0_i32_0 : i32, i32
  }
  func.func @transform_8(%arg0: i32) -> (i32, i32) {
    %c0_i32 = arith.constant 0 : i32
    %c0_i32_0 = arith.constant 0 : i32
    %c0_i32_1 = arith.constant 0 : i32
    return %c0_i32, %c0_i32_0 : i32, i32
  }
  func.func @transform_9(%arg0: i32) -> (i32, i32) {
    %c0_i32 = arith.constant 0 : i32
    %c0_i32_0 = arith.constant 0 : i32
    %c0_i32_1 = arith.constant 0 : i32
    return %c0_i32, %c0_i32_0 : i32, i32
  }
  func.func @transform_10(%arg0: i32) -> (i32, i32, i32) {
    %c0_i32 = arith.constant 0 : i32
    %c0_i32_0 = arith.constant 0 : i32
    %c0_i32_1 = arith.constant 0 : i32
    return %arg0, %c0_i32, %c0_i32_0 : i32, i32, i32
  }
}

</mosaic_0001>

<llo_original>
// kernel: tpu_custom_call.1
$region0: #{tpu_custom_call.1}
  #allocation0 [shape = 'u32[]', space=smem, size = 0x4, offset = 0x4, fixed_abs, tag = 'smem constant byte address 0x4 - core index']
  #allocation1 [shape = 'u32[144,128]{1,0:T(1,128)}', space=vmem, size = 0x12000, scoped, tag = 'internal scratch']
  #allocation2 [shape = 'f32[16,32]{1,0:T(8,128)}', space=vmem, size = 0x2000, scoped, tag = 'scratch operand']
  #allocation3 [shape = 'f32[16,32]{1,0:T(8,128)}', space=vmem, size = 0x2000, scoped, tag = 'scratch operand']
  %s0 = inlined_call_operand.hbm [shape: f32[4,2,8,8], index: 0, kind: input, shape index: {}]
  %s1 = inlined_call_operand.hbm [shape: f32[4,2,8,8], index: 1, kind: input, shape index: {}]
  %s2 = inlined_call_operand.hbm [shape: f32[16,32], index: 2, kind: input, shape index: {}]
  %s3 = inlined_call_operand.hbm [shape: f32[16,32], index: 3, kind: input, shape index: {}]
  %s4 = inlined_call_operand.hbm [shape: f32[8,8], index: 4, kind: input, shape index: {}]
  %s5 = inlined_call_operand.vmem [shape: f32[1,8], index: 5, kind: input, shape index: {}]
  %s6 = inlined_call_operand.hbm [shape: f32[16,128], index: 6, kind: input, shape index: {}]
  %s7 = inlined_call_operand.hbm [shape: f32[32,128], index: 7, kind: input, shape index: {}]
  %s8 = inlined_call_operand.vmem [shape: f32[1,128], index: 8, kind: input, shape index: {}]
  %s9 = inlined_call_operand.vmem [shape: f32[1,32], index: 9, kind: input, shape index: {}]
  %s10 = inlined_call_operand.hbm [shape: f32[4,16,32], index: 10, kind: output, shape index: {}]
  %s11 = sld [smem:[#allocation0]]
  $region105: #{tpu_custom_call.1} parent=0
    _
  %s13 = ssub.s32 1, %s11
  %s14 = scalar_select 0, %s13, %s11
  $region1: #{tpu_custom_call.1} parent=0
    #allocation4 [shape = 'u8[16384]{0}', space=vmem, size = 0x4000, scoped, tag = 'input window, operand 0']
    #allocation5 [shape = 's32[2]{0}', space=sflag, size = 0x8, scoped, tag = 'scoped memory for tpu_custom_call.1']
    #allocation6 [shape = 's32[2]{0}', space=sflag, size = 0x8, scoped, tag = 'scoped memory for tpu_custom_call.1']
    #allocation7 [shape = 'u8[16384]{0}', space=vmem, size = 0x4000, scoped, tag = 'input window, operand 1']
    #allocation8 [shape = 's32[2]{0}', space=sflag, size = 0x8, scoped, tag = 'scoped memory for tpu_custom_call.1']
    #allocation9 [shape = 'u8[8192]{0}', space=vmem, size = 0x2000, scoped, tag = 'input window, operand 2, single buffered']
    #allocation10 [shape = 'u8[8192]{0}', space=vmem, size = 0x2000, scoped, tag = 'input window, operand 3, single buffered']
    #allocation11 [shape = 's32[1]{0}', space=sflag, size = 0x4, scoped, tag = 'scoped memory for tpu_custom_call.1']
    #allocation12 [shape = 'u8[4096]{0}', space=vmem, size = 0x1000, scoped, tag = 'input window, operand 4, single buffered']
    #allocation13 [shape = 'u8[8192]{0}', space=vmem, size = 0x2000, scoped, tag = 'input window, operand 6, single buffered']
    #allocation14 [shape = 's32[1]{0}', space=sflag, size = 0x4, scoped, tag = 'scoped memory for tpu_custom_call.1']
    #allocation15 [shape = 'u8[16384]{0}', space=vmem, size = 0x4000, scoped, tag = 'input window, operand 7, single buffered']
    #allocation16 [shape = 'u8[16384]{0}', space=vmem, size = 0x4000, scoped, tag = 'output window, operand 0']
    %15 = vsyncpa [#allocation5], 0
    %s16 = scalar_lea.sflag [#allocation5], 1
    %17 = vsyncpa %s16, 0
    %18 = vsyncpa [#allocation8], 0
    %s19 = scalar_lea.sflag [#allocation8], 1
    %20 = vsyncpa %s19, 0
    %21 = vsyncpa [#allocation11], 0
    %22 = vsyncpa [#allocation14], 0
    %23 = vsyncpa [#allocation6], 0
    %s24 = scalar_lea.sflag [#allocation6], 1
    %25 = vsyncpa %s24, 0
    loop: start=0, step=1, limit=6
    $region2: #{tpu_custom_call.1} parent=1 // loop_pre_header
      _
    $region3: #{tpu_custom_call.1} parent=1 // loop_header
      %s27 = sphi 0, %s31
      %p28 = scmp.ge.s32.totalorder %s27, 6
      %s37 = sphi 0, %s39
      %s40 = sphi 0, %s37
      %s41 = sphi 0, %s40
      %s57 = sphi 0, %s41
      %s63 = sphi 0, %s65
      %s66 = sphi 0, %s63
      %s67 = sphi 0, %s66
      %s83 = sphi 0, %s67
      %s87 = sphi 0, %s87
      %s89 = sphi 0, %s87
      %s90 = sphi 0, %s89
      %s104 = sphi 0, %s90
      %s108 = sphi 0, %s108
      %s110 = sphi 0, %s108
      %s111 = sphi 0, %s110
      %s125 = sphi 0, %s111
      %s129 = sphi 0, %s129
      %s131 = sphi 0, %s129
      %s132 = sphi 0, %s131
      %s146 = sphi 0, %s132
      %s150 = sphi 0, %s150
      %s152 = sphi 0, %s150
      %s153 = sphi 0, %s152
      %s167 = sphi 0, %s153
      %s171 = sphi 0, %s171
      %s173 = sphi 0, %s171
      %s174 = sphi 0, %s173
      %s188 = sphi 0, %s174
      %s192 = sphi 0, %s192
      %s194 = sphi 0, %s192
      %s195 = sphi 0, %s194
      %s209 = sphi 0, %s195
      %s213 = sphi 0, %s213
      %s215 = sphi 0, %s213
      %s216 = sphi 0, %s215
      %s230 = sphi 0, %s216
      %s234 = sphi 0, %s234
      %s236 = sphi 0, %s234
      %s237 = sphi 0, %s236
      %s251 = sphi 0, %s237
      %s257 = sphi 0, %s259
      %s260 = sphi 0, %s257
      %s261 = sphi 0, %s260
      %s277 = sphi 0, %s261
    $region4: #{tpu_custom_call.1} parent=1 // loop_header_branch
      %30 = sbr.rel (%p28) target = $region8
    $region5: #{tpu_custom_call.1} parent=1 // loop_body
      %s32 = ssub.s32 %s27, 1
      %s33 = ssub.s32 %s27, 2
      %s34 = sadd.s32 %s27, 1
      %s35 = ssub.s32 %s27, %s34
      %p36 = scmp.eq.s32.totalorder %s35, 0
      %s38 = sadd.s32 %s37, 1
      %s39 = scalar_select %p36, %s37, %s38
      %p42 = pneg %p36
      %p43 = scmp.eq.s32.totalorder %s27, 3
      %p44 = por %p42, %p43
      %p45 = scmp.ne.s32.totalorder %s37, %s40
      %p46 = scmp.eq.s32.totalorder %s27, 0
      %p47 = por %p45, %p46
      %p48 = scmp.ne.s32.totalorder %s37, %s40
      %p49 = scmp.eq.s32.totalorder %s32, 3
      %p50 = por %p48, %p49
      %p51 = scmp.ne.s32.totalorder %s40, %s41
      %p52 = scmp.eq.s32.totalorder %s32, 0
      %p53 = por %p51, %p52
      %p54 = scmp.ne.s32.totalorder %s40, %s41
      %p55 = scmp.eq.s32.totalorder %s33, 3
      %p56 = por %p54, %p55
      %p58 = scmp.ne.s32.totalorder %s41, %s57
      %p59 = scmp.eq.s32.totalorder %s33, 0
      %p60 = por %p58, %p59
      %s61 = ssub.s32 %s27, %s34
      %p62 = scmp.eq.s32.totalorder %s61, 0
      %s64 = sadd.s32 %s63, 1
      %s65 = scalar_select %p62, %s63, %s64
      %p68 = pneg %p62
      %p69 = scmp.eq.s32.totalorder %s27, 3
      %p70 = por %p68, %p69
      %p71 = scmp.ne.s32.totalorder %s63, %s66
      %p72 = scmp.eq.s32.totalorder %s27, 0
      %p73 = por %p71, %p72
      %p74 = scmp.ne.s32.totalorder %s63, %s66
      %p75 = scmp.eq.s32.totalorder %s32, 3
      %p76 = por %p74, %p75
      %p77 = scmp.ne.s32.totalorder %s66, %s67
      %p78 = scmp.eq.s32.totalorder %s32, 0
      %p79 = por %p77, %p78
      %p80 = scmp.ne.s32.totalorder %s66, %s67
      %p81 = scmp.eq.s32.totalorder %s33, 3
      %p82 = por %p80, %p81
      %p84 = scmp.ne.s32.totalorder %s67, %s83
      %p85 = scmp.eq.s32.totalorder %s33, 0
      %p86 = por %p84, %p85
      %s88 = sadd.s32 %s87, 1
      %p91 = scmp.eq.s32.totalorder %s27, 3
      %p92 = scmp.ne.s32.totalorder %s87, %s89
      %p93 = scmp.eq.s32.totalorder %s27, 0
      %p94 = por %p92, %p93
      %p95 = scmp.ne.s32.totalorder %s87, %s89
      %p96 = scmp.eq.s32.totalorder %s32, 3
      %p97 = por %p95, %p96
      %p98 = scmp.ne.s32.totalorder %s89, %s90
      %p99 = scmp.eq.s32.totalorder %s32, 0
      %p100 = por %p98, %p99
      %p101 = scmp.ne.s32.totalorder %s89, %s90
      %p102 = scmp.eq.s32.totalorder %s33, 3
      %p103 = por %p101, %p102
      %p105 = scmp.ne.s32.totalorder %s90, %s104
      %p106 = scmp.eq.s32.totalorder %s33, 0
      %p107 = por %p105, %p106
      %s109 = sadd.s32 %s108, 1
      %p112 = scmp.eq.s32.totalorder %s27, 3
      %p113 = scmp.ne.s32.totalorder %s108, %s110
      %p114 = scmp.eq.s32.totalorder %s27, 0
      %p115 = por %p113, %p114
      %p116 = scmp.ne.s32.totalorder %s108, %s110
      %p117 = scmp.eq.s32.totalorder %s32, 3
      %p118 = por %p116, %p117
      %p119 = scmp.ne.s32.totalorder %s110, %s111
      %p120 = scmp.eq.s32.totalorder %s32, 0
      %p121 = por %p119, %p120
      %p122 = scmp.ne.s32.totalorder %s110, %s111
      %p123 = scmp.eq.s32.totalorder %s33, 3
      %p124 = por %p122, %p123
      %p126 = scmp.ne.s32.totalorder %s111, %s125
      %p127 = scmp.eq.s32.totalorder %s33, 0
      %p128 = por %p126, %p127
      %s130 = sadd.s32 %s129, 1
      %p133 = scmp.eq.s32.totalorder %s27, 3
      %p134 = scmp.ne.s32.totalorder %s129, %s131
      %p135 = scmp.eq.s32.totalorder %s27, 0
      %p136 = por %p134, %p135
      %p137 = scmp.ne.s32.totalorder %s129, %s131
      %p138 = scmp.eq.s32.totalorder %s32, 3
      %p139 = por %p137, %p138
      %p140 = scmp.ne.s32.totalorder %s131, %s132
      %p141 = scmp.eq.s32.totalorder %s32, 0
      %p142 = por %p140, %p141
      %p143 = scmp.ne.s32.totalorder %s131, %s132
      %p144 = scmp.eq.s32.totalorder %s33, 3
      %p145 = por %p143, %p144
      %p147 = scmp.ne.s32.totalorder %s132, %s146
      %p148 = scmp.eq.s32.totalorder %s33, 0
      %p149 = por %p147, %p148
      %s151 = sadd.s32 %s150, 1
      %p154 = scmp.eq.s32.totalorder %s27, 3
      %p155 = scmp.ne.s32.totalorder %s150, %s152
      %p156 = scmp.eq.s32.totalorder %s27, 0
      %p157 = por %p155, %p156
      %p158 = scmp.ne.s32.totalorder %s150, %s152
      %p159 = scmp.eq.s32.totalorder %s32, 3
      %p160 = por %p158, %p159
      %p161 = scmp.ne.s32.totalorder %s152, %s153
      %p162 = scmp.eq.s32.totalorder %s32, 0
      %p163 = por %p161, %p162
      %p164 = scmp.ne.s32.totalorder %s152, %s153
      %p165 = scmp.eq.s32.totalorder %s33, 3
      %p166 = por %p164, %p165
      %p168 = scmp.ne.s32.totalorder %s153, %s167
      %p169 = scmp.eq.s32.totalorder %s33, 0
      %p170 = por %p168, %p169
      %s172 = sadd.s32 %s171, 1
      %p175 = scmp.eq.s32.totalorder %s27, 3
      %p176 = scmp.ne.s32.totalorder %s171, %s173
      %p177 = scmp.eq.s32.totalorder %s27, 0
      %p178 = por %p176, %p177
      %p179 = scmp.ne.s32.totalorder %s171, %s173
      %p180 = scmp.eq.s32.totalorder %s32, 3
      %p181 = por %p179, %p180
      %p182 = scmp.ne.s32.totalorder %s173, %s174
      %p183 = scmp.eq.s32.totalorder %s32, 0
      %p184 = por %p182, %p183
      %p185 = scmp.ne.s32.totalorder %s173, %s174
      %p186 = scmp.eq.s32.totalorder %s33, 3
      %p187 = por %p185, %p186
      %p189 = scmp.ne.s32.totalorder %s174, %s188
      %p190 = scmp.eq.s32.totalorder %s33, 0
      %p191 = por %p189, %p190
      %s193 = sadd.s32 %s192, 1
      %p196 = scmp.eq.s32.totalorder %s27, 3
      %p197 = scmp.ne.s32.totalorder %s192, %s194
      %p198 = scmp.eq.s32.totalorder %s27, 0
      %p199 = por %p197, %p198
      %p200 = scmp.ne.s32.totalorder %s192, %s194
      %p201 = scmp.eq.s32.totalorder %s32, 3
      %p202 = por %p200, %p201
      %p203 = scmp.ne.s32.totalorder %s194, %s195
      %p204 = scmp.eq.s32.totalorder %s32, 0
      %p205 = por %p203, %p204
      %p206 = scmp.ne.s32.totalorder %s194, %s195
      %p207 = scmp.eq.s32.totalorder %s33, 3
      %p208 = por %p206, %p207
      %p210 = scmp.ne.s32.totalorder %s195, %s209
      %p211 = scmp.eq.s32.totalorder %s33, 0
      %p212 = por %p210, %p211
      %s214 = sadd.s32 %s213, 1
      %p217 = scmp.eq.s32.totalorder %s27, 3
      %p218 = scmp.ne.s32.totalorder %s213, %s215
      %p219 = scmp.eq.s32.totalorder %s27, 0
      %p220 = por %p218, %p219
      %p221 = scmp.ne.s32.totalorder %s213, %s215
      %p222 = scmp.eq.s32.totalorder %s32, 3
      %p223 = por %p221, %p222
      %p224 = scmp.ne.s32.totalorder %s215, %s216
      %p225 = scmp.eq.s32.totalorder %s32, 0
      %p226 = por %p224, %p225
      %p227 = scmp.ne.s32.totalorder %s215, %s216
      %p228 = scmp.eq.s32.totalorder %s33, 3
      %p229 = por %p227, %p228
      %p231 = scmp.ne.s32.totalorder %s216, %s230
      %p232 = scmp.eq.s32.totalorder %s33, 0
      %p233 = por %p231, %p232
      %s235 = sadd.s32 %s234, 1
      %p238 = scmp.eq.s32.totalorder %s27, 3
      %p239 = scmp.ne.s32.totalorder %s234, %s236
      %p240 = scmp.eq.s32.totalorder %s27, 0
      %p241 = por %p239, %p240
      %p242 = scmp.ne.s32.totalorder %s234, %s236
      %p243 = scmp.eq.s32.totalorder %s32, 3
      %p244 = por %p242, %p243
      %p245 = scmp.ne.s32.totalorder %s236, %s237
      %p246 = scmp.eq.s32.totalorder %s32, 0
      %p247 = por %p245, %p246
      %p248 = scmp.ne.s32.totalorder %s236, %s237
      %p249 = scmp.eq.s32.totalorder %s33, 3
      %p250 = por %p248, %p249
      %p252 = scmp.ne.s32.totalorder %s237, %s251
      %p253 = scmp.eq.s32.totalorder %s33, 0
      %p254 = por %p252, %p253
      %s255 = ssub.s32 %s27, %s34
      %p256 = scmp.eq.s32.totalorder %s255, 0
      %s258 = sadd.s32 %s257, 1
      %s259 = scalar_select %p256, %s257, %s258
      %p262 = pneg %p256
      %p263 = scmp.eq.s32.totalorder %s27, 3
      %p264 = por %p262, %p263
      %p265 = scmp.ne.s32.totalorder %s257, %s260
      %p266 = scmp.eq.s32.totalorder %s27, 0
      %p267 = por %p265, %p266
      %p268 = scmp.ne.s32.totalorder %s257, %s260
      %p269 = scmp.eq.s32.totalorder %s32, 3
      %p270 = por %p268, %p269
      %p271 = scmp.ne.s32.totalorder %s260, %s261
      %p272 = scmp.eq.s32.totalorder %s32, 0
      %p273 = por %p271, %p272
      %p274 = scmp.ne.s32.totalorder %s260, %s261
      %p275 = scmp.eq.s32.totalorder %s33, 3
      %p276 = por %p274, %p275
      %p278 = scmp.ne.s32.totalorder %s261, %s277
      %p279 = scmp.eq.s32.totalorder %s33, 0
      %p280 = por %p278, %p279
      %p281 = scmp.le.s32.totalorder 1, %s27
      %p282 = scmp.lt.s32.totalorder %s27, 5
      %p283 = pnand %p281, %p282
      %p284 = pneg %p283
      // Predicated region
      $region9: #{tpu_custom_call.1} parent=5 // pred_check
        _
      $region10: #{tpu_custom_call.1} parent=5 // pred_check_branch
        %286 = sbr.rel (%p283) target = $region12
      $region11: #{tpu_custom_call.1} parent=5 // pred_region
        %s287 = ssub.s32 %s27, 1
        // Predicated region
        $region13: #{tpu_custom_call.1} parent=11 // pred_check
          %p288 = pneg %p100
        $region14: #{tpu_custom_call.1} parent=11 // pred_check_branch
          %290 = sbr.rel (%p288) target = $region16
        $region15: #{tpu_custom_call.1} parent=11 // pred_region
          %s292 = ssub.s32 256, 256
          %293 = vsyncadd [#allocation8], %s292
          %s294 = sshll.u32 [#allocation9], 4
          %s295 = int_to_ptr.vmem [resolvable:$true] %s294
          %300 = dma.hbm_to_vmem [thread:$0]  %s2, 256, %s295, [#allocation8], 128, 128, 8
        $region16: #{tpu_custom_call.1} parent=11 // pred_fallthru
          _
        // Predicated region
        $region17: #{tpu_custom_call.1} parent=11 // pred_check
          %p301 = pneg %p121
        $region18: #{tpu_custom_call.1} parent=11 // pred_check_branch
          %303 = sbr.rel (%p301) target = $region20
        $region19: #{tpu_custom_call.1} parent=11 // pred_region
          %s305 = ssub.s32 256, 256
          %306 = vsyncadd [#allocation11], %s305
          %s307 = sshll.u32 [#allocation10], 4
          %s308 = int_to_ptr.vmem [resolvable:$true] %s307
          %313 = dma.hbm_to_vmem [thread:$0]  %s3, 256, %s308, [#allocation11], 128, 128, 8
        $region20: #{tpu_custom_call.1} parent=11 // pred_fallthru
          _
        // Predicated region
        $region21: #{tpu_custom_call.1} parent=11 // pred_check
          %p314 = pneg %p142
        $region22: #{tpu_custom_call.1} parent=11 // pred_check_branch
          %316 = sbr.rel (%p314) target = $region24
        $region23: #{tpu_custom_call.1} parent=11 // pred_region
          %s318 = ssub.s32 128, 128
          %319 = vsyncadd [#allocation11], %s318
          %s321 = sshll.u32 [#allocation12], 4
          %s322 = int_to_ptr.vmem [resolvable:$true] %s321
          %324 = dma.hbm_to_vmem [thread:$0]  %s4, 128, %s322, [#allocation11]
        $region24: #{tpu_custom_call.1} parent=11 // pred_fallthru
          _
        // Predicated region
        $region25: #{tpu_custom_call.1} parent=11 // pred_check
          %p325 = pneg %p163
        $region26: #{tpu_custom_call.1} parent=11 // pred_check_branch
          %327 = sbr.rel (%p325) target = $region28
        $region27: #{tpu_custom_call.1} parent=11 // pred_region
          _
        $region28: #{tpu_custom_call.1} parent=11 // pred_fallthru
          _
        // Predicated region
        $region29: #{tpu_custom_call.1} parent=11 // pred_check
          %p328 = pneg %p184
        $region30: #{tpu_custom_call.1} parent=11 // pred_check_branch
          %330 = sbr.rel (%p328) target = $region32
        $region31: #{tpu_custom_call.1} parent=11 // pred_region
          %s332 = ssub.s32 256, 256
          %333 = vsyncadd [#allocation14], %s332
          %s334 = sshll.u32 [#allocation13], 4
          %s335 = int_to_ptr.vmem [resolvable:$true] %s334
          %340 = dma.hbm_to_vmem [thread:$0]  %s6, 256, %s335, [#allocation14], 128, 128, 8
        $region32: #{tpu_custom_call.1} parent=11 // pred_fallthru
          _
        // Predicated region
        $region33: #{tpu_custom_call.1} parent=11 // pred_check
          %p341 = pneg %p205
        $region34: #{tpu_custom_call.1} parent=11 // pred_check_branch
          %343 = sbr.rel (%p341) target = $region36
        $region35: #{tpu_custom_call.1} parent=11 // pred_region
          %s345 = ssub.s32 512, 512
          %346 = vsyncadd [#allocation14], %s345
          %s347 = sshll.u32 [#allocation15], 4
          %s348 = int_to_ptr.vmem [resolvable:$true] %s347
          %353 = dma.hbm_to_vmem [thread:$0]  %s7, 512, %s348, [#allocation14], 128, 128, 8
        $region36: #{tpu_custom_call.1} parent=11 // pred_fallthru
          _
        // Predicated region
        $region37: #{tpu_custom_call.1} parent=11 // pred_check
          %p354 = pneg %p226
        $region38: #{tpu_custom_call.1} parent=11 // pred_check_branch
          %356 = sbr.rel (%p354) target = $region40
        $region39: #{tpu_custom_call.1} parent=11 // pred_region
          _
        $region40: #{tpu_custom_call.1} parent=11 // pred_fallthru
          _
        // Predicated region
        $region41: #{tpu_custom_call.1} parent=11 // pred_check
          %p357 = pneg %p247
        $region42: #{tpu_custom_call.1} parent=11 // pred_check_branch
          %359 = sbr.rel (%p357) target = $region44
        $region43: #{tpu_custom_call.1} parent=11 // pred_region
          _
        $region44: #{tpu_custom_call.1} parent=11 // pred_fallthru
          _
      $region12: #{tpu_custom_call.1} parent=5 // pred_fallthru
        _
      %p360 = scmp.lt.s32.totalorder %s27, 4
      // Predicated region
      $region45: #{tpu_custom_call.1} parent=5 // pred_check
        %p361 = pneg %p360
      $region46: #{tpu_custom_call.1} parent=5 // pred_check_branch
        %363 = sbr.rel (%p361) target = $region48
      $region47: #{tpu_custom_call.1} parent=5 // pred_region
        // Predicated region
        $region49: #{tpu_custom_call.1} parent=47 // pred_check
          %p364 = pneg %p47
        $region50: #{tpu_custom_call.1} parent=47 // pred_check_branch
          %366 = sbr.rel (%p364) target = $region52
        $region51: #{tpu_custom_call.1} parent=47 // pred_region
          %s367 = sand.u32 %s37, 1
          %s368 = scalar_lea.sflag [#allocation5], %s367
          %s369 = sand.u32 %s37, 1
          %s370 = smul.addr %s369, 16
          %s371 = scalar_lea.vmem [#allocation4], %s370
          %s373 = ssub.s32 256, 256
          %374 = vsyncadd %s368, %s373
          %s375 = smul.addr %s27, 2
          %s376 = smul.addr %s375, 128
          %s377 = scalar_lea.hbm %s0, %s376
          %s378 = sshll.u32 %s371, 4
          %s379 = int_to_ptr.vmem [resolvable:$true] %s378
          %384 = dma.hbm_to_vmem [thread:$0]  %s377, 256, %s379, %s368, 128, 128, 8
        $region52: #{tpu_custom_call.1} parent=47 // pred_fallthru
          _
        // Predicated region
        $region53: #{tpu_custom_call.1} parent=47 // pred_check
          %p385 = pneg %p73
        $region54: #{tpu_custom_call.1} parent=47 // pred_check_branch
          %387 = sbr.rel (%p385) target = $region56
        $region55: #{tpu_custom_call.1} parent=47 // pred_region
          %s388 = sand.u32 %s27, 1
          %s389 = scalar_lea.sflag [#allocation8], %s388
          %s390 = sand.u32 %s63, 1
          %s391 = smul.addr %s390, 16
          %s392 = scalar_lea.vmem [#allocation7], %s391
          %s394 = ssub.s32 256, 256
          %395 = vsyncadd %s389, %s394
          %s396 = smul.addr %s27, 2
          %s397 = smul.addr %s396, 128
          %s398 = scalar_lea.hbm %s1, %s397
          %s399 = sshll.u32 %s392, 4
          %s400 = int_to_ptr.vmem [resolvable:$true] %s399
          %405 = dma.hbm_to_vmem [thread:$0]  %s398, 256, %s400, %s389, 128, 128, 8
        $region56: #{tpu_custom_call.1} parent=47 // pred_fallthru
          _
      $region48: #{tpu_custom_call.1} parent=5 // pred_fallthru
        _
      %p406 = scmp.le.s32.totalorder 1, %s27
      %p407 = scmp.lt.s32.totalorder %s27, 5
      %p408 = pnand %p406, %p407
      %p409 = pneg %p408
      // Predicated region
      $region57: #{tpu_custom_call.1} parent=5 // pred_check
        _
      $region58: #{tpu_custom_call.1} parent=5 // pred_check_branch
        %411 = sbr.rel (%p408) target = $region60
      $region59: #{tpu_custom_call.1} parent=5 // pred_region
        %s412 = ssub.s32 %s27, 1
        %s413 = sand.u32 %s40, 1
        %s414 = scalar_lea.sflag [#allocation5], %s413
        %s415 = sand.u32 %s40, 1
        %s416 = smul.addr %s415, 16
        %s417 = scalar_lea.vmem [#allocation4], %s416
        // Predicated region
        $region61: #{tpu_custom_call.1} parent=59 // pred_check
          %p418 = pneg %p53
        $region62: #{tpu_custom_call.1} parent=59 // pred_check_branch
          %420 = sbr.rel (%p418) target = $region64
        $region63: #{tpu_custom_call.1} parent=59 // pred_region
          %421 = dma.done %s414, 256
        $region64: #{tpu_custom_call.1} parent=59 // pred_fallthru
          _
        %s422 = sand.u32 %s32, 1
        %s423 = scalar_lea.sflag [#allocation8], %s422
        %s424 = sand.u32 %s66, 1
        %s425 = smul.addr %s424, 16
        %s426 = scalar_lea.vmem [#allocation7], %s425
        // Predicated region
        $region65: #{tpu_custom_call.1} parent=59 // pred_check
          %p427 = pneg %p79
        $region66: #{tpu_custom_call.1} parent=59 // pred_check_branch
          %429 = sbr.rel (%p427) target = $region68
        $region67: #{tpu_custom_call.1} parent=59 // pred_region
          %430 = dma.done %s423, 256
        $region68: #{tpu_custom_call.1} parent=59 // pred_fallthru
          _
        // Predicated region
        $region69: #{tpu_custom_call.1} parent=59 // pred_check
          %p431 = pneg %p100
        $region70: #{tpu_custom_call.1} parent=59 // pred_check_branch
          %433 = sbr.rel (%p431) target = $region72
        $region71: #{tpu_custom_call.1} parent=59 // pred_region
          %434 = dma.done [#allocation8], 256
        $region72: #{tpu_custom_call.1} parent=59 // pred_fallthru
          _
        // Predicated region
        $region73: #{tpu_custom_call.1} parent=59 // pred_check
          %p435 = pneg %p121
        $region74: #{tpu_custom_call.1} parent=59 // pred_check_branch
          %437 = sbr.rel (%p435) target = $region76
        $region75: #{tpu_custom_call.1} parent=59 // pred_region
          %438 = dma.done [#allocation11], 256
        $region76: #{tpu_custom_call.1} parent=59 // pred_fallthru
          _
        // Predicated region
        $region77: #{tpu_custom_call.1} parent=59 // pred_check
          %p439 = pneg %p142
        $region78: #{tpu_custom_call.1} parent=59 // pred_check_branch
          %441 = sbr.rel (%p439) target = $region80
        $region79: #{tpu_custom_call.1} parent=59 // pred_region
          %442 = dma.done [#allocation11], 128
        $region80: #{tpu_custom_call.1} parent=59 // pred_fallthru
          _
        // Predicated region
        $region81: #{tpu_custom_call.1} parent=59 // pred_check
          %p443 = pneg %p184
        $region82: #{tpu_custom_call.1} parent=59 // pred_check_branch
          %445 = sbr.rel (%p443) target = $region84
        $region83: #{tpu_custom_call.1} parent=59 // pred_region
          %446 = dma.done [#allocation14], 256
        $region84: #{tpu_custom_call.1} parent=59 // pred_fallthru
          _
        // Predicated region
        $region85: #{tpu_custom_call.1} parent=59 // pred_check
          %p447 = pneg %p205
        $region86: #{tpu_custom_call.1} parent=59 // pred_check_branch
          %449 = sbr.rel (%p447) target = $region88
        $region87: #{tpu_custom_call.1} parent=59 // pred_region
          %450 = dma.done [#allocation14], 512
        $region88: #{tpu_custom_call.1} parent=59 // pred_fallthru
          _
        %s451 = sand.u32 %s40, 1
        %s452 = scalar_lea.sflag [#allocation5], %s451
        %s453 = sand.u32 %s40, 1
        %s454 = smul.addr %s453, 16
        %s455 = scalar_lea.vmem [#allocation4], %s454
        %p456 = pneg %p53
        %p457 = pneg %p50
        %s458 = sand.u32 %s32, 1
        %s459 = scalar_lea.sflag [#allocation8], %s458
        %s460 = sand.u32 %s66, 1
        %s461 = smul.addr %s460, 16
        %s462 = scalar_lea.vmem [#allocation7], %s461
        %p463 = pneg %p79
        %p464 = pneg %p76
        %p465 = pneg %p100
        %p466 = pneg %p97
        %p467 = pneg %p121
        %p468 = pneg %p118
        %p469 = pneg %p142
        %p470 = pneg %p139
        %p471 = pneg %p163
        %p472 = pneg %p160
        %p473 = pneg %p184
        %p474 = pneg %p181
        %p475 = pneg %p205
        %p476 = pneg %p202
        %p477 = pneg %p226
        %p478 = pneg %p223
        %p479 = pneg %p247
        %p480 = pneg %p244
        %p481 = pneg %p273
        %p482 = pneg %p270
        %s483 = sand.u32 %s260, 1
        %s484 = scalar_lea.sflag [#allocation6], %s483
        %s485 = sand.u32 %s260, 1
        %s486 = smul.addr %s485, 16
        %s487 = scalar_lea.vmem [#allocation16], %s486
        %p488 = scmp.eq.s32.totalorder %s32, 0
        // Predicated region
        $region89: #{tpu_custom_call.1} parent=59 // pred_check
          %p489 = pneg %p488
        $region90: #{tpu_custom_call.1} parent=59 // pred_check_branch
          %491 = sbr.rel (%p489) target = $region92
        $region91: #{tpu_custom_call.1} parent=59 // pred_region
          %v492 = vld [vmem:[#allocation9] sm:$0xff]
          %v493 = vld [vmem:[#allocation9 + $0x8] sm:$0xff]
          %vm494 = vcmask 261120
          %495 = vst.msk [vmem:[#allocation2] sm:$0xff] %vm494, %v492
          %496 = vst.msk [vmem:[#allocation2 + $0x8] sm:$0xff] %vm494, %v493
          %v497 = vld [vmem:[#allocation10] sm:$0xff]
          %v498 = vld [vmem:[#allocation10 + $0x8] sm:$0xff]
          %499 = vst.msk [vmem:[#allocation3] sm:$0xff] %vm494, %v497
          %500 = vst.msk [vmem:[#allocation3 + $0x8] sm:$0xff] %vm494, %v498
        $region92: #{tpu_custom_call.1} parent=59 // pred_fallthru
          _
        %v501 = vld [vmem:[%s417] sm:$0xff]
        %v502 = vld [vmem:[%s417 + $0x8] sm:$0xff]
        %v503 = vld [vmem:[%s426] sm:$0xff]
        %v504 = vld [vmem:[%s426 + $0x8] sm:$0xff]
        %v505 = vld [vmem:[#allocation2] sm:$0xff]
        %v506 = vld [vmem:[#allocation2 + $0x8] sm:$0xff]
        %v507 = vld [vmem:[#allocation3] sm:$0xff]
        %v508 = vld [vmem:[#allocation3 + $0x8] sm:$0xff]
        %vm509 = vcmask 64512
        %v511 = vsel %vm509, %v503, 0
        %513 = vmatprep.subr.mxu0 0.0
        %514 = vmatpush1.msra.mxu0 0.0
        %515 = vmatprep.subr.mxu0 0.0
        %516 = vmatpush1.msra.mxu0 0.0
        %517 = vmatprep.subr.mxu0 0.0
        %518 = vmatpush1.msra.mxu0 0.0
        %519 = vmatprep.subr.mxu0 0.0
        %520 = vmatpush1.msra.mxu0 0.0
        %521 = vmatprep.subr.mxu0 0.0
        %522 = vmatpush1.msra.mxu0 0.0
        %523 = vmatprep.subr.mxu0 0.0
        %524 = vmatpush1.msra.mxu0 0.0
        %525 = vmatprep.subr.mxu0 0.0
        %526 = vmatpush1.msra.mxu0 0.0
        %527 = vmatprep.subr.mxu0 0.0
        %528 = vmatpush1.msra.mxu0 0.0
        %529 = vmatprep.subr.mxu0 0.0
        %530 = vmatpush1.msra.mxu0 0.0
        %531 = vmatprep.subr.mxu0 0.0
        %532 = vmatpush1.msra.mxu0 0.0
        %533 = vmatprep.subr.mxu0 0.0
        %534 = vmatpush1.msra.mxu0 0.0
        %535 = vmatprep.subr.mxu0 0.0
        %536 = vmatpush1.msra.mxu0 0.0
        %537 = vmatprep.subr.mxu0 0.0
        %538 = vmatpush1.msra.mxu0 0.0
        %539 = vmatprep.subr.mxu0 0.0
        %540 = vmatpush1.msra.mxu0 0.0
        %541 = vmatprep.subr.mxu0 0.0
        %542 = vmatpush1.msra.mxu0 0.0
        %543 = vmatprep.subr.mxu0 0.0
        %544 = vmatpush1.msra.mxu0 %v501
        %545 = vmatprep.subr.mxu0 0.0
        %546 = vmatpush2.msra.mxu0 0.0
        %547 = vmatprep.subr.mxu0 0.0
        %548 = vmatpush2.msra.mxu0 0.0
        %549 = vmatprep.subr.mxu0 0.0
        %550 = vmatpush2.msra.mxu0 0.0
        %551 = vmatprep.subr.mxu0 0.0
        %552 = vmatpush2.msra.mxu0 0.0
        %553 = vmatprep.subr.mxu0 0.0
        %554 = vmatpush2.msra.mxu0 0.0
        %555 = vmatprep.subr.mxu0 0.0
        %556 = vmatpush2.msra.mxu0 0.0
        %557 = vmatprep.subr.mxu0 0.0
        %558 = vmatpush2.msra.mxu0 0.0
        %559 = vmatprep.subr.mxu0 0.0
        %560 = vmatpush2.msra.mxu0 0.0
        %561 = vmatprep.subr.mxu0 0.0
        %562 = vmatpush2.msra.mxu0 0.0
        %563 = vmatprep.subr.mxu0 0.0
        %564 = vmatpush2.msra.mxu0 0.0
        %565 = vmatprep.subr.mxu0 0.0
        %566 = vmatpush2.msra.mxu0 0.0
        %567 = vmatprep.subr.mxu0 0.0
        %568 = vmatpush2.msra.mxu0 0.0
        %569 = vmatprep.subr.mxu0 0.0
        %570 = vmatpush2.msra.mxu0 0.0
        %571 = vmatprep.subr.mxu0 0.0
        %572 = vmatpush2.msra.mxu0 0.0
        %573 = vmatprep.subr.mxu0 0.0
        %574 = vmatpush2.msra.mxu0 0.0
        %575 = vmatprep.subr.mxu0 0.0
        %576 = vmatpush2.msra.mxu0 0.0
        %577 = vmatprep.mubr.f32.mxu0 0.0
        %578 = vmatmul.mubr.f32.gmra.mxu0 %v511
        %v579 = vpop.f32.mrf.mxu0
        %v580 = vadd.f32 0.0, %v579
        %v581 = vpop.f32.mrf.mxu0
        %582 = vdwg.mxu0
        %v584 = vsel %vm509, %v504, 0
        %586 = vmatprep.subr.mxu0 0.0
        %587 = vmatpush1.msra.mxu0 0.0
        %588 = vmatprep.subr.mxu0 0.0
        %589 = vmatpush1.msra.mxu0 0.0
        %590 = vmatprep.subr.mxu0 0.0
        %591 = vmatpush1.msra.mxu0 0.0
        %592 = vmatprep.subr.mxu0 0.0
        %593 = vmatpush1.msra.mxu0 0.0
        %594 = vmatprep.subr.mxu0 0.0
        %595 = vmatpush1.msra.mxu0 0.0
        %596 = vmatprep.subr.mxu0 0.0
        %597 = vmatpush1.msra.mxu0 0.0
        %598 = vmatprep.subr.mxu0 0.0
        %599 = vmatpush1.msra.mxu0 0.0
        %600 = vmatprep.subr.mxu0 0.0
        %601 = vmatpush1.msra.mxu0 0.0
        %602 = vmatprep.subr.mxu0 0.0
        %603 = vmatpush1.msra.mxu0 0.0
        %604 = vmatprep.subr.mxu0 0.0
        %605 = vmatpush1.msra.mxu0 0.0
        %606 = vmatprep.subr.mxu0 0.0
        %607 = vmatpush1.msra.mxu0 0.0
        %608 = vmatprep.subr.mxu0 0.0
        %609 = vmatpush1.msra.mxu0 0.0
        %610 = vmatprep.subr.mxu0 0.0
        %611 = vmatpush1.msra.mxu0 0.0
        %612 = vmatprep.subr.mxu0 0.0
        %613 = vmatpush1.msra.mxu0 0.0
        %614 = vmatprep.subr.mxu0 0.0
        %615 = vmatpush1.msra.mxu0 0.0
        %616 = vmatprep.subr.mxu0 0.0
        %617 = vmatpush1.msra.mxu0 %v502
        %618 = vmatprep.subr.mxu0 0.0
        %619 = vmatpush2.msra.mxu0 0.0
        %620 = vmatprep.subr.mxu0 0.0
        %621 = vmatpush2.msra.mxu0 0.0
        %622 = vmatprep.subr.mxu0 0.0
        %623 = vmatpush2.msra.mxu0 0.0
        %624 = vmatprep.subr.mxu0 0.0
        %625 = vmatpush2.msra.mxu0 0.0
        %626 = vmatprep.subr.mxu0 0.0
        %627 = vmatpush2.msra.mxu0 0.0
        %628 = vmatprep.subr.mxu0 0.0
        %629 = vmatpush2.msra.mxu0 0.0
        %630 = vmatprep.subr.mxu0 0.0
        %631 = vmatpush2.msra.mxu0 0.0
        %632 = vmatprep.subr.mxu0 0.0
        %633 = vmatpush2.msra.mxu0 0.0
        %634 = vmatprep.subr.mxu0 0.0
        %635 = vmatpush2.msra.mxu0 0.0
        %636 = vmatprep.subr.mxu0 0.0
        %637 = vmatpush2.msra.mxu0 0.0
        %638 = vmatprep.subr.mxu0 0.0
        %639 = vmatpush2.msra.mxu0 0.0
        %640 = vmatprep.subr.mxu0 0.0
        %641 = vmatpush2.msra.mxu0 0.0
        %642 = vmatprep.subr.mxu0 0.0
        %643 = vmatpush2.msra.mxu0 0.0
        %644 = vmatprep.subr.mxu0 0.0
        %645 = vmatpush2.msra.mxu0 0.0
        %646 = vmatprep.subr.mxu0 0.0
        %647 = vmatpush2.msra.mxu0 0.0
        %648 = vmatprep.subr.mxu0 0.0
        %649 = vmatpush2.msra.mxu0 0.0
        %650 = vmatprep.mubr.f32.mxu0 0.0
        %651 = vmatmul.mubr.f32.gmra.mxu0 %v584
        %v652 = vpop.f32.mrf.mxu0
        %v653 = vadd.f32 0.0, %v652
        %v654 = vpop.f32.mrf.mxu0
        %655 = vdwg.mxu0
        %v656 = vld [vmem:[#allocation12] sm:$0xff]
        %v657 = vld [vmem:[%s5] sm:$0x1]
        %v659 = vlaneseq
        %v660 = vshrl.u32 %v659, 7
        %v661 = vsub.s32 0, %v660
        %v662 = vrot.slane %v657, %v661
        %v665 = vsel %vm509, %v580, 0
        %v668 = vsel %vm509, %v653, 0
        %670 = vmatprep.subr.mxu0 0.0
        %671 = vmatpush1.msra.mxu0 0.0
        %672 = vmatprep.subr.mxu0 0.0
        %673 = vmatpush1.msra.mxu0 0.0
        %674 = vmatprep.subr.mxu0 0.0
        %675 = vmatpush1.msra.mxu0 0.0
        %676 = vmatprep.subr.mxu0 0.0
        %677 = vmatpush1.msra.mxu0 0.0
        %678 = vmatprep.subr.mxu0 0.0
        %679 = vmatpush1.msra.mxu0 0.0
        %680 = vmatprep.subr.mxu0 0.0
        %681 = vmatpush1.msra.mxu0 0.0
        %682 = vmatprep.subr.mxu0 0.0
        %683 = vmatpush1.msra.mxu0 0.0
        %684 = vmatprep.subr.mxu0 0.0
        %685 = vmatpush1.msra.mxu0 0.0
        %686 = vmatprep.subr.mxu0 0.0
        %687 = vmatpush1.msra.mxu0 0.0
        %688 = vmatprep.subr.mxu0 0.0
        %689 = vmatpush1.msra.mxu0 0.0
        %690 = vmatprep.subr.mxu0 0.0
        %691 = vmatpush1.msra.mxu0 0.0
        %692 = vmatprep.subr.mxu0 0.0
        %693 = vmatpush1.msra.mxu0 0.0
        %694 = vmatprep.subr.mxu0 0.0
        %695 = vmatpush1.msra.mxu0 0.0
        %696 = vmatprep.subr.mxu0 0.0
        %697 = vmatpush1.msra.mxu0 0.0
        %698 = vmatprep.subr.mxu0 0.0
        %699 = vmatpush1.msra.mxu0 0.0
        %700 = vmatprep.subr.mxu0 0.0
        %701 = vmatpush1.msra.mxu0 %v656
        %702 = vmatprep.subr.mxu0 0.0
        %703 = vmatpush2.msra.mxu0 0.0
        %704 = vmatprep.subr.mxu0 0.0
        %705 = vmatpush2.msra.mxu0 0.0
        %706 = vmatprep.subr.mxu0 0.0
        %707 = vmatpush2.msra.mxu0 0.0
        %708 = vmatprep.subr.mxu0 0.0
        %709 = vmatpush2.msra.mxu0 0.0
        %710 = vmatprep.subr.mxu0 0.0
        %711 = vmatpush2.msra.mxu0 0.0
        %712 = vmatprep.subr.mxu0 0.0
        %713 = vmatpush2.msra.mxu0 0.0
        %714 = vmatprep.subr.mxu0 0.0
        %715 = vmatpush2.msra.mxu0 0.0
        %716 = vmatprep.subr.mxu0 0.0
        %717 = vmatpush2.msra.mxu0 0.0
        %718 = vmatprep.subr.mxu0 0.0
        %719 = vmatpush2.msra.mxu0 0.0
        %720 = vmatprep.subr.mxu0 0.0
        %721 = vmatpush2.msra.mxu0 0.0
        %722 = vmatprep.subr.mxu0 0.0
        %723 = vmatpush2.msra.mxu0 0.0
        %724 = vmatprep.subr.mxu0 0.0
        %725 = vmatpush2.msra.mxu0 0.0
        %726 = vmatprep.subr.mxu0 0.0
        %727 = vmatpush2.msra.mxu0 0.0
        %728 = vmatprep.subr.mxu0 0.0
        %729 = vmatpush2.msra.mxu0 0.0
        %730 = vmatprep.subr.mxu0 0.0
        %731 = vmatpush2.msra.mxu0 0.0
        %732 = vmatprep.subr.mxu0 0.0
        %733 = vmatpush2.msra.mxu0 0.0
        %734 = vmatprep.mubr.f32.mxu0 0.0
        %735 = vmatmul.mubr.f32.gmra.mxu0 %v665
        %v736 = vpop.f32.mrf.mxu0
        %v737 = vadd.f32 %v662, %v736
        %v738 = vpop.f32.mrf.mxu0
        %739 = vmatprep.mubr.f32.mxu0 0.0
        %740 = vmatmul.mubr.f32.gmra.mxu0 %v668
        %v741 = vpop.f32.mrf.mxu0
        %v742 = vadd.f32 %v662, %v741
        %v743 = vpop.f32.mrf.mxu0
        %744 = vdwg.mxu0
        %747 = vrot.lane.b32.xlu0 %v737, 8
        %v748 = vpop.permute.xlu0 %747
        %749 = vrot.lane.b32.xlu0 %v742, 8
        %v750 = vpop.permute.xlu0 %749
        %v753 = vsel %vm509, %v501, %v748
        %v754 = vsel %vm509, %v502, %v750
        %v755 = vld [vmem:[#allocation13] sm:$0xff]
        %v756 = vld [vmem:[#allocation13 + $0x8] sm:$0xff]
        %v757 = vld [vmem:[#allocation15] sm:$0xff]
        %v758 = vld [vmem:[#allocation15 + $0x8] sm:$0xff]
        %v759 = vld [vmem:[#allocation15 + $0x10] sm:$0xff]
        %v760 = vld [vmem:[#allocation15 + $0x18] sm:$0xff]
        %vm761 = vcmask 261120
        %v763 = vsel %vm761, %v505, 0
        %v766 = vsel %vm761, %v506, 0
        %768 = vmatprep.subr.mxu0 0.0
        %769 = vmatpush1.msra.mxu0 0.0
        %770 = vmatprep.subr.mxu0 0.0
        %771 = vmatpush1.msra.mxu0 0.0
        %772 = vmatprep.subr.mxu0 0.0
        %773 = vmatpush1.msra.mxu0 0.0
        %774 = vmatprep.subr.mxu0 0.0
        %775 = vmatpush1.msra.mxu0 0.0
        %776 = vmatprep.subr.mxu0 0.0
        %777 = vmatpush1.msra.mxu0 0.0
        %778 = vmatprep.subr.mxu0 0.0
        %779 = vmatpush1.msra.mxu0 0.0
        %780 = vmatprep.subr.mxu0 0.0
        %781 = vmatpush1.msra.mxu0 0.0
        %782 = vmatprep.subr.mxu0 0.0
        %783 = vmatpush1.msra.mxu0 0.0
        %784 = vmatprep.subr.mxu0 0.0
        %785 = vmatpush1.msra.mxu0 0.0
        %786 = vmatprep.subr.mxu0 0.0
        %787 = vmatpush1.msra.mxu0 0.0
        %788 = vmatprep.subr.mxu0 0.0
        %789 = vmatpush1.msra.mxu0 0.0
        %790 = vmatprep.subr.mxu0 0.0
        %791 = vmatpush1.msra.mxu0 0.0
        %792 = vmatprep.subr.mxu0 0.0
        %793 = vmatpush1.msra.mxu0 %v760
        %794 = vmatprep.subr.mxu0 0.0
        %795 = vmatpush1.msra.mxu0 %v759
        %796 = vmatprep.subr.mxu0 0.0
        %797 = vmatpush1.msra.mxu0 %v758
        %798 = vmatprep.subr.mxu0 0.0
        %799 = vmatpush1.msra.mxu0 %v757
        %800 = vmatprep.subr.mxu0 0.0
        %801 = vmatpush2.msra.mxu0 0.0
        %802 = vmatprep.subr.mxu0 0.0
        %803 = vmatpush2.msra.mxu0 0.0
        %804 = vmatprep.subr.mxu0 0.0
        %805 = vmatpush2.msra.mxu0 0.0
        %806 = vmatprep.subr.mxu0 0.0
        %807 = vmatpush2.msra.mxu0 0.0
        %808 = vmatprep.subr.mxu0 0.0
        %809 = vmatpush2.msra.mxu0 0.0
        %810 = vmatprep.subr.mxu0 0.0
        %811 = vmatpush2.msra.mxu0 0.0
        %812 = vmatprep.subr.mxu0 0.0
        %813 = vmatpush2.msra.mxu0 0.0
        %814 = vmatprep.subr.mxu0 0.0
        %815 = vmatpush2.msra.mxu0 0.0
        %816 = vmatprep.subr.mxu0 0.0
        %817 = vmatpush2.msra.mxu0 0.0
        %818 = vmatprep.subr.mxu0 0.0
        %819 = vmatpush2.msra.mxu0 0.0
        %820 = vmatprep.subr.mxu0 0.0
        %821 = vmatpush2.msra.mxu0 0.0
        %822 = vmatprep.subr.mxu0 0.0
        %823 = vmatpush2.msra.mxu0 0.0
        %824 = vmatprep.subr.mxu0 0.0
        %825 = vmatpush2.msra.mxu0 0.0
        %826 = vmatprep.subr.mxu0 0.0
        %827 = vmatpush2.msra.mxu0 0.0
        %828 = vmatprep.subr.mxu0 0.0
        %829 = vmatpush2.msra.mxu0 0.0
        %830 = vmatprep.subr.mxu0 0.0
        %831 = vmatpush2.msra.mxu0 0.0
        %832 = vmatprep.mubr.f32.mxu0 0.0
        %833 = vmatmul.mubr.f32.gmra.mxu0 %v763
        %v834 = vpop.f32.mrf.mxu0
        %v835 = vadd.f32 0.0, %v834
        %v836 = vpop.f32.mrf.mxu0
        %837 = vmatprep.mubr.f32.mxu0 0.0
        %838 = vmatmul.mubr.f32.gmra.mxu0 %v766
        %v839 = vpop.f32.mrf.mxu0
        %v840 = vadd.f32 0.0, %v839
        %v841 = vpop.f32.mrf.mxu0
        %842 = vdwg.mxu0
        %vm843 = vcmask 130048
        %v845 = vsel %vm843, %v753, 0
        %v848 = vsel %vm843, %v754, 0
        %850 = vmatprep.subr.mxu0 0.0
        %851 = vmatpush1.msra.mxu0 0.0
        %852 = vmatprep.subr.mxu0 0.0
        %853 = vmatpush1.msra.mxu0 0.0
        %854 = vmatprep.subr.mxu0 0.0
        %855 = vmatpush1.msra.mxu0 0.0
        %856 = vmatprep.subr.mxu0 0.0
        %857 = vmatpush1.msra.mxu0 0.0
        %858 = vmatprep.subr.mxu0 0.0
        %859 = vmatpush1.msra.mxu0 0.0
        %860 = vmatprep.subr.mxu0 0.0
        %861 = vmatpush1.msra.mxu0 0.0
        %862 = vmatprep.subr.mxu0 0.0
        %863 = vmatpush1.msra.mxu0 0.0
        %864 = vmatprep.subr.mxu0 0.0
        %865 = vmatpush1.msra.mxu0 0.0
        %866 = vmatprep.subr.mxu0 0.0
        %867 = vmatpush1.msra.mxu0 0.0
        %868 = vmatprep.subr.mxu0 0.0
        %869 = vmatpush1.msra.mxu0 0.0
        %870 = vmatprep.subr.mxu0 0.0
        %871 = vmatpush1.msra.mxu0 0.0
        %872 = vmatprep.subr.mxu0 0.0
        %873 = vmatpush1.msra.mxu0 0.0
        %874 = vmatprep.subr.mxu0 0.0
        %875 = vmatpush1.msra.mxu0 0.0
        %876 = vmatprep.subr.mxu0 0.0
        %877 = vmatpush1.msra.mxu0 0.0
        %878 = vmatprep.subr.mxu0 0.0
        %879 = vmatpush1.msra.mxu0 %v756
        %880 = vmatprep.subr.mxu0 0.0
        %881 = vmatpush1.msra.mxu0 %v755
        %882 = vmatprep.subr.mxu0 0.0
        %883 = vmatpush2.msra.mxu0 0.0
        %884 = vmatprep.subr.mxu0 0.0
        %885 = vmatpush2.msra.mxu0 0.0
        %886 = vmatprep.subr.mxu0 0.0
        %887 = vmatpush2.msra.mxu0 0.0
        %888 = vmatprep.subr.mxu0 0.0
        %889 = vmatpush2.msra.mxu0 0.0
        %890 = vmatprep.subr.mxu0 0.0
        %891 = vmatpush2.msra.mxu0 0.0
        %892 = vmatprep.subr.mxu0 0.0
        %893 = vmatpush2.msra.mxu0 0.0
        %894 = vmatprep.subr.mxu0 0.0
        %895 = vmatpush2.msra.mxu0 0.0
        %896 = vmatprep.subr.mxu0 0.0
        %897 = vmatpush2.msra.mxu0 0.0
        %898 = vmatprep.subr.mxu0 0.0
        %899 = vmatpush2.msra.mxu0 0.0
        %900 = vmatprep.subr.mxu0 0.0
        %901 = vmatpush2.msra.mxu0 0.0
        %902 = vmatprep.subr.mxu0 0.0
        %903 = vmatpush2.msra.mxu0 0.0
        %904 = vmatprep.subr.mxu0 0.0
        %905 = vmatpush2.msra.mxu0 0.0
        %906 = vmatprep.subr.mxu0 0.0
        %907 = vmatpush2.msra.mxu0 0.0
        %908 = vmatprep.subr.mxu0 0.0
        %909 = vmatpush2.msra.mxu0 0.0
        %910 = vmatprep.subr.mxu0 0.0
        %911 = vmatpush2.msra.mxu0 0.0
        %912 = vmatprep.subr.mxu0 0.0
        %913 = vmatpush2.msra.mxu0 0.0
        %914 = vmatprep.mubr.f32.mxu0 0.0
        %915 = vmatmul.mubr.f32.gmra.mxu0 %v845
        %v916 = vpop.f32.mrf.mxu0
        %v917 = vadd.f32 %v835, %v916
        %v918 = vpop.f32.mrf.mxu0
        %919 = vmatprep.mubr.f32.mxu0 0.0
        %920 = vmatmul.mubr.f32.gmra.mxu0 %v848
        %v921 = vpop.f32.mrf.mxu0
        %v922 = vadd.f32 %v840, %v921
        %v923 = vpop.f32.mrf.mxu0
        %924 = vdwg.mxu0
        %v925 = vld [vmem:[%s8] sm:$0x1]
        %v927 = vlaneseq
        %v928 = vshrl.u32 %v927, 7
        %v929 = vsub.s32 0, %v928
        %v930 = vrot.slane %v925, %v929
        %v932 = vadd.f32 %v917, %v930
        %v933 = vadd.f32 %v922, %v930
        %v934 = vld [vmem:[%s9] sm:$0x1]
        %v935 = vxor.u32 %v932, 2147483648
        %v936 = vxor.u32 %v933, 2147483648
        %v937 = vmul.f32 %v935, 1.442695
        %v938 = vpow.pop %v937
        %v939 = vmul.f32 %v936, 1.442695
        %v940 = vpow.pop %v939
        %v941 = vadd.f32 %v938, 1.0
        %v942 = vadd.f32 %v940, 1.0
        %v943 = vrcp.pop %v941
        %v944 = vmul.f32 1.0, %v943
        %v945 = vrcp.pop %v942
        %v946 = vmul.f32 1.0, %v945
        %v948 = vlaneseq
        %v949 = vshrl.u32 %v948, 7
        %v950 = vsub.s32 0, %v949
        %v951 = vrot.slane %v934, %v950
        %v953 = vmul.f32 %v944, %v951
        %v954 = vmul.f32 %v946, %v951
        %v955 = vsel %vm761, %v953, 0.0
        %956 = vadd.xlane.f32.xlu0 %v955
        %v957 = vpop.xlane.xlu0 %956
        %v958 = vsel %vm761, %v954, 0.0
        %959 = vadd.xlane.f32.xlu0 %v958
        %v960 = vpop.xlane.xlu0 %959
        %961 = vrot.lane.b32.xlu0 %v951, 32
        %v962 = vpop.permute.xlu0 %961
        %v964 = vmul.f32 %v944, %v962
        %v965 = vmul.f32 %v946, %v962
        %968 = vrot.lane.b32.xlu0 %v964, 96
        %v969 = vpop.permute.xlu0 %968
        %970 = vrot.lane.b32.xlu0 %v965, 96
        %v971 = vpop.permute.xlu0 %970
        %v974 = vsel %vm761, %v969, 0.0
        %975 = vadd.xlane.f32.xlu0 %v974
        %v976 = vpop.xlane.xlu0 %975
        %v977 = vsel %vm761, %v971, 0.0
        %978 = vadd.xlane.f32.xlu0 %v977
        %v979 = vpop.xlane.xlu0 %978
        %980 = vrot.lane.b32.xlu0 %v951, 96
        %v981 = vpop.permute.xlu0 %980
        %v983 = vmul.f32 %v944, %v981
        %v984 = vmul.f32 %v946, %v981
        %987 = vrot.lane.b32.xlu0 %v983, 32
        %v988 = vpop.permute.xlu0 %987
        %989 = vrot.lane.b32.xlu0 %v984, 32
        %v990 = vpop.permute.xlu0 %989
        %v993 = vsel %vm761, %v988, 0.0
        %994 = vadd.xlane.f32.xlu0 %v993
        %v995 = vpop.xlane.xlu0 %994
        %v996 = vsel %vm761, %v990, 0.0
        %997 = vadd.xlane.f32.xlu0 %v996
        %v998 = vpop.xlane.xlu0 %997
        %v999 = vtanh.pop %v932
        %v1000 = vtanh.pop %v933
        %v1001 = vmul.f32 %v976, %v507
        %v1002 = vmul.f32 %v979, %v508
        %v1003 = vmul.f32 %v957, %v999
        %v1004 = vmul.f32 %v960, %v1000
        %1007 = vrot.lane.b32.xlu0 %v1003, 64
        %v1008 = vpop.permute.xlu0 %1007
        %1009 = vrot.lane.b32.xlu0 %v1004, 64
        %v1010 = vpop.permute.xlu0 %1009
        %v1013 = vadd.f32 %v1001, %v1008
        %v1014 = vadd.f32 %v1002, %v1010
        %v1015 = vtanh.pop %v1013
        %v1016 = vtanh.pop %v1014
        %v1017 = vmul.f32 %v995, %v1015
        %v1018 = vmul.f32 %v998, %v1016
        %1019 = vst.msk [vmem:[#allocation3] sm:$0xff] %vm761, %v1013
        %1020 = vst.msk [vmem:[#allocation3 + $0x8] sm:$0xff] %vm761, %v1014
        %1021 = vst.msk [vmem:[#allocation2] sm:$0xff] %vm761, %v1017
        %1022 = vst.msk [vmem:[#allocation2 + $0x8] sm:$0xff] %vm761, %v1018
        %1023 = vst.msk [vmem:[%s487] sm:$0xff] %vm761, %v1017
        %1024 = vst.msk [vmem:[%s487 + $0x8] sm:$0xff] %vm761, %v1018
        %s1025 = sand.u32 %s260, 1
        %s1026 = scalar_lea.sflag [#allocation6], %s1025
        %s1027 = sand.u32 %s260, 1
        %s1028 = smul.addr %s1027, 16
        %s1029 = scalar_lea.vmem [#allocation16], %s1028
        // Predicated region
        $region93: #{tpu_custom_call.1} parent=59 // pred_check
          %p1030 = pneg %p270
        $region94: #{tpu_custom_call.1} parent=59 // pred_check_branch
          %1032 = sbr.rel (%p1030) target = $region96
        $region95: #{tpu_custom_call.1} parent=59 // pred_region
          %s1034 = ssub.s32 256, 256
          %1035 = vsyncadd %s1026, %s1034
          %s1036 = smul.addr %s32, 2
          %s1037 = smul.addr %s1036, 128
          %s1038 = scalar_lea.hbm %s10, %s1037
          %s1039 = sshll.u32 %s1029, 4
          %s1040 = int_to_ptr.vmem [resolvable:$true] %s1039
          %1045 = dma.vmem_to_hbm [thread:$0]  %s1040, 256, %s1038, %s1026, 128, 128, 8
        $region96: #{tpu_custom_call.1} parent=59 // pred_fallthru
          _
      $region60: #{tpu_custom_call.1} parent=5 // pred_fallthru
        _
      %p1046 = scmp.le.s32.totalorder 2, %s27
      // Predicated region
      $region97: #{tpu_custom_call.1} parent=5 // pred_check
        %p1047 = pneg %p1046
      $region98: #{tpu_custom_call.1} parent=5 // pred_check_branch
        %1049 = sbr.rel (%p1047) target = $region100
      $region99: #{tpu_custom_call.1} parent=5 // pred_region
        %s1050 = ssub.s32 %s27, 2
        // Predicated region
        $region101: #{tpu_custom_call.1} parent=99 // pred_check
          %p1051 = pneg %p276
        $region102: #{tpu_custom_call.1} parent=99 // pred_check_branch
          %1053 = sbr.rel (%p1051) target = $region104
        $region103: #{tpu_custom_call.1} parent=99 // pred_region
          %s1054 = sand.u32 %s261, 1
          %s1055 = scalar_lea.sflag [#allocation6], %s1054
          %s1056 = sand.u32 %s261, 1
          %s1057 = smul.addr %s1056, 16
          %s1058 = scalar_lea.vmem [#allocation16], %s1057
          %1059 = dma.done %s1055, 256
        $region104: #{tpu_custom_call.1} parent=99 // pred_fallthru
          _
      $region100: #{tpu_custom_call.1} parent=5 // pred_fallthru
        _
    $region6: #{tpu_custom_call.1} parent=1 // loop_footer
      %s31 = sadd.s32 1, %s27
    $region7: #{tpu_custom_call.1} parent=1 // loop_footer_branch
      %26 = sbr.rel target = $region3
    $region8: #{tpu_custom_call.1} parent=1 // loop_exit
      _
    %1060 = vsyncpa [#allocation5], 1
    %s1061 = scalar_lea.sflag [#allocation5], 1
    %1062 = vsyncpa %s1061, 1
    %1063 = vsyncpa [#allocation8], 1
    %s1064 = scalar_lea.sflag [#allocation8], 1
    %1065 = vsyncpa %s1064, 1
    %1066 = vsyncpa [#allocation11], 1
    %1067 = vsyncpa [#allocation14], 1
    %1068 = vsyncpa [#allocation6], 1
    %s1069 = scalar_lea.sflag [#allocation6], 1
    %1070 = vsyncpa %s1069, 1

</llo_original>
